<compile_context>
chip_gen: v7x
topology: tpu7x:2x2x1
jax: 0.10.0
libtpu: 0.0.40
codegen_flags: <defaults>
</compile_context>

<pallas_src>
import jax
import jax.numpy as jnp
from jax import lax
from jax.experimental import pallas as pl
from jax.experimental.pallas import tpu as pltpu


def _round_up(n, m):
    return ((n + m - 1) // m) * m


def _pad_to(arr, shape):
    pads = [(0, t - s) for s, t in zip(arr.shape, shape)]
    return jnp.pad(arr, pads)


def _device_kind():
    try:
        return jax.devices()[0].device_kind.lower()
    except Exception:  # pragma: no cover - backend not initialized
        return ""


_KIND = _device_kind()
# v7x has 2 TensorCores per chip; everything else here has 1.
_NUM_TC = 2 if ("v7" in _KIND or "7x" in _KIND) else 1
# bf16 elementwise only where the VPU is natively bf16 (v6e / v7x).
_EW_DTYPE = (jnp.bfloat16
             if ("v6" in _KIND or "v7" in _KIND or "7x" in _KIND)
             else jnp.float32)


def critic_kernel(xa_ref, w1_ref, b1_ref, w2_ref, b2_ref, w3_ref, b3_ref,
                  o_ref):
    # Layer 1: fused fc11(x)+fc12(a) as a single matmul (x|a concatenated in
    # the wrapper, w11/w12 stacked and b11+b12 folded at init). bf16 MXU
    # inputs, f32 accumulation; bias-add/ReLU in the elementwise dtype.
    h1 = jnp.dot(xa_ref[...], w1_ref[...], preferred_element_type=jnp.float32)
    h1 = jnp.maximum(h1.astype(b1_ref.dtype) + b1_ref[...], 0.0)

    # Layer 2 + ReLU.
    h2 = jnp.dot(h1.astype(w2_ref.dtype), w2_ref[...],
                 preferred_element_type=jnp.float32)
    h2 = jnp.maximum(h2.astype(b2_ref.dtype) + b2_ref[...], 0.0)

    # Layer 3 (no nonlinearity on the Q-value). w3 is a (1, h2p) row; contract
    # h2p so the MXU emits a lane-dense (1, tb) Q row for this batch tile.
    q = lax.dot_general(
        w3_ref[...], h2.astype(w3_ref.dtype),
        dimension_numbers=(((1,), (1,)), ((), ())),
        preferred_element_type=jnp.float32)          # (1, tb)
    o_ref[...] = q + b3_ref[...]                      # b3 is (1, 1), broadcast


def critic_forward(x, a, params, *, tb=None):
    """x: (B, nb_states) f32, a: (B, nb_actions) f32 -> (B, 1) f32."""
    B, ns = x.shape
    na = a.shape[1]
    h1p = params["w1"].shape[1]
    h2p = params["w2"].shape[1]
    wdt = params["w1"].dtype

    # Batch tile: one tile per TensorCore (2 grid steps on v7x so the
    # "parallel" axis uses both cores; one big tile on v5e/v6e), capped at
    # 1024 rows so the per-tile working set stays well inside scoped VMEM.
    if tb is None:
        bp8 = _round_up(max(B, 1), 8)
        tb = min(1024, _round_up(pl.cdiv(bp8, _NUM_TC), 8))
    tb = max(8, _round_up(tb, 8))
    bp = _round_up(max(B, 1), tb)
    ntiles = bp // tb

    # Concatenate state|action and cast to the weight dtype once in the
    # wrapper (halves input DMA bytes, no per-tile casts in the kernel).
    xa = jnp.concatenate([x.astype(wdt), a.astype(wdt)], axis=1)
    xa = _pad_to(xa, (bp, ns + na))

    def row_spec(shape):            # streamed per batch tile
        return pl.BlockSpec(shape, lambda i: (i, 0))

    def const_spec(shape):          # VMEM-resident across the whole grid
        return pl.BlockSpec(shape, lambda i: (0, 0))

    q_rows = pl.pallas_call(
        critic_kernel,
        out_shape=jax.ShapeDtypeStruct((ntiles, tb), jnp.float32),
        grid=(ntiles,),
        in_specs=[
            row_spec((tb, ns + na)),
            const_spec((ns + na, h1p)),
            const_spec((1, h1p)),
            const_spec((h1p, h2p)),
            const_spec((1, h2p)),
            const_spec((1, h2p)),       # w3 stored as a row
            const_spec((1, 1)),         # b3 scalar
        ],
        out_specs=row_spec((1, tb)),
        compiler_params=pltpu.CompilerParams(
            dimension_semantics=("parallel",),
            vmem_limit_bytes=48 * 1024 * 1024),
    )(xa, params["w1"], params["b1"], params["w2"], params["b2"],
      params["w3"], params["b3"])

    return q_rows.reshape(bp, 1)[:B]


def init_critic_params(key, nb_states, nb_actions, hidden1=400, hidden2=300,
                       init_w=0.003, weight_dtype=jnp.bfloat16,
                       bias_dtype=_EW_DTYPE):
    """Deterministic init mirroring DDPG's fanin_init; final layer ±init_w.

    Weights are stored transposed to (in, out), fc11/fc12 are stacked into a
    single layer-1 weight (with b1 = b11 + b12 pre-folded), and all hidden
    widths are zero-padded to multiples of 128 so every matmul is lane-dense.
    Zero padding keeps padded lanes exactly zero through ReLU, so the math on
    the real columns is unchanged. fc3's weight is stored as a (1, h2p) row.
    """
    h1p = _round_up(hidden1, 128)
    h2p = _round_up(hidden2, 128)

    ks = jax.random.split(key, 8)

    def fanin_uniform(k, fan_in, shape):
        v = 1.0 / jnp.sqrt(jnp.float32(fan_in))
        return jax.random.uniform(k, shape, jnp.float32, -v, v)

    w11 = fanin_uniform(ks[0], nb_states, (nb_states, hidden1))
    b11 = fanin_uniform(ks[1], nb_states, (1, hidden1))
    w12 = fanin_uniform(ks[2], nb_actions, (nb_actions, hidden1))
    b12 = fanin_uniform(ks[3], nb_actions, (1, hidden1))
    w2 = fanin_uniform(ks[4], hidden1, (hidden1, hidden2))
    b2 = fanin_uniform(ks[5], hidden1, (1, hidden2))
    w3 = jax.random.uniform(ks[6], (hidden2, 1), jnp.float32, -init_w, init_w)
    b3 = jax.random.uniform(ks[7], (1, 1), jnp.float32, -init_w, init_w)

    w1 = jnp.concatenate([w11, w12], axis=0)          # (ns+na, hidden1)
    b1 = b11 + b12                                    # folded once at init
    w3_row = w3.T                                     # (1, hidden2)

    return {
        "w1": _pad_to(w1, (nb_states + nb_actions, h1p)).astype(weight_dtype),
        "b1": _pad_to(b1, (1, h1p)).astype(bias_dtype),
        "w2": _pad_to(w2, (h1p, h2p)).astype(weight_dtype),
        "b2": _pad_to(b2, (1, h2p)).astype(bias_dtype),
        "w3": _pad_to(w3_row, (1, h2p)).astype(weight_dtype),
        "b3": b3.astype(jnp.float32),
    }


def critic_ref(x, a, params):
    """Pure-JAX reference using the exact same (padded, mixed-dtype) params."""
    wdt = params["w1"].dtype
    xa = jnp.concatenate([x.astype(wdt), a.astype(wdt)], axis=1)
    h1 = jnp.dot(xa, params["w1"], preferred_element_type=jnp.float32)
    h1 = jnp.maximum(h1.astype(params["b1"].dtype) + params["b1"], 0.0)
    h2 = jnp.dot(h1.astype(wdt), params["w2"],
                 preferred_element_type=jnp.float32)
    h2 = jnp.maximum(h2.astype(params["b2"].dtype) + params["b2"], 0.0)
    q = jnp.dot(h2.astype(wdt), params["w3"].T,
                preferred_element_type=jnp.float32)
    return q + params["b3"]


if __name__ == "__main__":
    # Small shapes consistent with Critic(nb_states, nb_actions, h1, h2).
    B, nb_states, nb_actions = 2, 8, 4
    hidden1, hidden2 = 32, 32

    key = jax.random.PRNGKey(0)
    kx, ka, kp = jax.random.split(key, 3)
    x = jax.random.normal(kx, (B, nb_states), dtype=jnp.float32)
    a = jax.random.normal(ka, (B, nb_actions), dtype=jnp.float32)
    params = init_critic_params(kp, nb_states, nb_actions, hidden1, hidden2)

    out = critic_forward(x, a, params)
    jax.block_until_ready(out)

    ref = critic_ref(x, a, params)
    assert out.shape == (B, 1), out.shape
    assert jnp.allclose(out, ref, atol=2e-3, rtol=2e-2), "mismatch vs reference"

    print("KERNEL_OK")
</pallas_src>

<mosaic_0001>
module attributes {stable_mosaic.version = 11 : i64} {
  func.func @critic_kernel(%arg0: i32, %arg1: memref<8x12xbf16, #tpu.memory_space<vmem>>, %arg2: memref<12x128xbf16, #tpu.memory_space<vmem>>, %arg3: memref<1x128xf32, #tpu.memory_space<vmem>>, %arg4: memref<128x128xbf16, #tpu.memory_space<vmem>>, %arg5: memref<1x128xf32, #tpu.memory_space<vmem>>, %arg6: memref<1x128xbf16, #tpu.memory_space<vmem>>, %arg7: memref<1x1xf32, #tpu.memory_space<vmem>>, %arg8: memref<1x8xf32, #tpu.memory_space<vmem>>) attributes {dimension_semantics = [#tpu.dimension_semantics<parallel>], iteration_bounds = array<i64: 1>, scalar_prefetch = 0 : i64, scratch_operands = 0 : i64, tpu.core_type = #tpu.core_type<tc>, window_params = [{transform_indices = @transform_0, window_bounds = array<i64: 8, 12>}, {pipeline_mode = #tpu.pipeline_mode<synchronous>, transform_indices = @transform_1, window_bounds = array<i64: 12, 128>}, {pipeline_mode = #tpu.pipeline_mode<synchronous>, transform_indices = @transform_2, window_bounds = array<i64: 1, 128>}, {pipeline_mode = #tpu.pipeline_mode<synchronous>, transform_indices = @transform_3, window_bounds = array<i64: 128, 128>}, {pipeline_mode = #tpu.pipeline_mode<synchronous>, transform_indices = @transform_4, window_bounds = array<i64: 1, 128>}, {pipeline_mode = #tpu.pipeline_mode<synchronous>, transform_indices = @transform_5, window_bounds = array<i64: 1, 128>}, {pipeline_mode = #tpu.pipeline_mode<synchronous>, transform_indices = @transform_6, window_bounds = array<i64: 1, 1>}, {transform_indices = @transform_7, window_bounds = array<i64: 1, 8>}]} {
    %c0 = arith.constant 0 : index
    %c0_0 = arith.constant 0 : index
    %0 = vector.load %arg1[%c0, %c0_0] : memref<8x12xbf16, #tpu.memory_space<vmem>>, vector<8x12xbf16>
    %c0_1 = arith.constant 0 : index
    %c0_2 = arith.constant 0 : index
    %1 = vector.load %arg2[%c0_1, %c0_2] : memref<12x128xbf16, #tpu.memory_space<vmem>>, vector<12x128xbf16>
    %cst = arith.constant dense<0.000000e+00> : vector<8x128xf32>
    %2 = tpu.matmul %0, %1, %cst {dimension_numbers = #tpu.dot_dimension_numbers<[1], [0], [0], [1], [0, 0, 1, 1], [], []>} : vector<8x12xbf16>, vector<12x128xbf16>, vector<8x128xf32> -> vector<8x128xf32>
    %c0_3 = arith.constant 0 : index
    %c0_4 = arith.constant 0 : index
    %3 = vector.load %arg3[%c0_3, %c0_4] : memref<1x128xf32, #tpu.memory_space<vmem>>, vector<1x128xf32>
    %4 = vector.broadcast %3 : vector<1x128xf32> to vector<8x128xf32>
    %5 = arith.addf %2, %4 : vector<8x128xf32>
    %cst_5 = arith.constant 0.000000e+00 : f32
    %6 = vector.broadcast %cst_5 : f32 to vector<8x128xf32>
    %7 = arith.maximumf %5, %6 : vector<8x128xf32>
    %8 = arith.truncf %7 : vector<8x128xf32> to vector<8x128xbf16>
    %c0_6 = arith.constant 0 : index
    %c0_7 = arith.constant 0 : index
    %9 = vector.load %arg4[%c0_6, %c0_7] : memref<128x128xbf16, #tpu.memory_space<vmem>>, vector<128x128xbf16>
    %cst_8 = arith.constant dense<0.000000e+00> : vector<8x128xf32>
    %10 = tpu.matmul %8, %9, %cst_8 {dimension_numbers = #tpu.dot_dimension_numbers<[1], [0], [0], [1], [0, 0, 1, 1], [], []>} : vector<8x128xbf16>, vector<128x128xbf16>, vector<8x128xf32> -> vector<8x128xf32>
    %c0_9 = arith.constant 0 : index
    %c0_10 = arith.constant 0 : index
    %11 = vector.load %arg5[%c0_9, %c0_10] : memref<1x128xf32, #tpu.memory_space<vmem>>, vector<1x128xf32>
    %12 = vector.broadcast %11 : vector<1x128xf32> to vector<8x128xf32>
    %13 = arith.addf %10, %12 : vector<8x128xf32>
    %cst_11 = arith.constant 0.000000e+00 : f32
    %14 = vector.broadcast %cst_11 : f32 to vector<8x128xf32>
    %15 = arith.maximumf %13, %14 : vector<8x128xf32>
    %c0_12 = arith.constant 0 : index
    %c0_13 = arith.constant 0 : index
    %16 = vector.load %arg6[%c0_12, %c0_13] : memref<1x128xbf16, #tpu.memory_space<vmem>>, vector<1x128xbf16>
    %17 = arith.truncf %15 : vector<8x128xf32> to vector<8x128xbf16>
    %cst_14 = arith.constant dense<0.000000e+00> : vector<1x8xf32>
    %18 = tpu.matmul %16, %17, %cst_14 {dimension_numbers = #tpu.dot_dimension_numbers<[1], [1], [0], [0], [0, 0, 1, 0], [], []>} : vector<1x128xbf16>, vector<8x128xbf16>, vector<1x8xf32> -> vector<1x8xf32>
    %c0_15 = arith.constant 0 : index
    %c0_16 = arith.constant 0 : index
    %19 = vector.load %arg7[%c0_15, %c0_16] : memref<1x1xf32, #tpu.memory_space<vmem>>, vector<1x1xf32>
    %20 = vector.broadcast %19 : vector<1x1xf32> to vector<1x8xf32>
    %21 = arith.addf %18, %20 : vector<1x8xf32>
    %c0_17 = arith.constant 0 : index
    %c0_18 = arith.constant 0 : index
    %22 = vector.load %arg8[%c0_17, %c0_18] : memref<1x8xf32, #tpu.memory_space<vmem>>, vector<1x8xf32>
    tpu.vector_store %arg8[%c0_17, %c0_18], %21 {strides = array<i32>} : memref<1x8xf32, #tpu.memory_space<vmem>>, vector<1x8xf32>,
    return
  }
  func.func @transform_0(%arg0: i32) -> (i32, i32) {
    %c0_i32 = arith.constant 0 : i32
    %c0_i32_0 = arith.constant 0 : i32
    return %arg0, %c0_i32 : i32, i32
  }
  func.func @transform_1(%arg0: i32) -> (i32, i32) {
    %c0_i32 = arith.constant 0 : i32
    %c0_i32_0 = arith.constant 0 : i32
    %c0_i32_1 = arith.constant 0 : i32
    return %c0_i32, %c0_i32_0 : i32, i32
  }
  func.func @transform_2(%arg0: i32) -> (i32, i32) {
    %c0_i32 = arith.constant 0 : i32
    %c0_i32_0 = arith.constant 0 : i32
    %c0_i32_1 = arith.constant 0 : i32
    return %c0_i32, %c0_i32_0 : i32, i32
  }
  func.func @transform_3(%arg0: i32) -> (i32, i32) {
    %c0_i32 = arith.constant 0 : i32
    %c0_i32_0 = arith.constant 0 : i32
    %c0_i32_1 = arith.constant 0 : i32
    return %c0_i32, %c0_i32_0 : i32, i32
  }
  func.func @transform_4(%arg0: i32) -> (i32, i32) {
    %c0_i32 = arith.constant 0 : i32
    %c0_i32_0 = arith.constant 0 : i32
    %c0_i32_1 = arith.constant 0 : i32
    return %c0_i32, %c0_i32_0 : i32, i32
  }
  func.func @transform_5(%arg0: i32) -> (i32, i32) {
    %c0_i32 = arith.constant 0 : i32
    %c0_i32_0 = arith.constant 0 : i32
    %c0_i32_1 = arith.constant 0 : i32
    return %c0_i32, %c0_i32_0 : i32, i32
  }
  func.func @transform_6(%arg0: i32) -> (i32, i32) {
    %c0_i32 = arith.constant 0 : i32
    %c0_i32_0 = arith.constant 0 : i32
    %c0_i32_1 = arith.constant 0 : i32
    return %c0_i32, %c0_i32_0 : i32, i32
  }
  func.func @transform_7(%arg0: i32) -> (i32, i32) {
    %c0_i32 = arith.constant 0 : i32
    %c0_i32_0 = arith.constant 0 : i32
    return %arg0, %c0_i32 : i32, i32
  }
}

</mosaic_0001>

<llo_original>
// kernel: tpu_custom_call.1
$region0: #{tpu_custom_call.1}
  #allocation0 [shape = 'u32[]', space=smem, size = 0x4, offset = 0x4, fixed_abs, tag = 'smem constant byte address 0x4 - core index']
  #allocation1 [shape = 'u32[144,128]{1,0:T(1,128)}', space=vmem, size = 0x12000, scoped, tag = 'internal scratch']
  #allocation2 [shape = 'f32[1,1]{1,0:T(1,128)S(1)}', space=vmem, size = 0x200, scoped, tag = 'scoped memory for tpu_custom_call.1']
  %s0 = inlined_call_operand.hbm [shape: bf16[8,12], index: 0, kind: input, shape index: {}]
  %s1 = inlined_call_operand.hbm [shape: bf16[12,128], index: 1, kind: input, shape index: {}]
  %s2 = inlined_call_operand.vmem [shape: f32[1,128], index: 2, kind: input, shape index: {}]
  %s3 = inlined_call_operand.hbm [shape: bf16[128,128], index: 3, kind: input, shape index: {}]
  %s4 = inlined_call_operand.vmem [shape: f32[1,128], index: 4, kind: input, shape index: {}]
  %s5 = inlined_call_operand.vmem [shape: bf16[1,128], index: 5, kind: input, shape index: {}]
  %s6 = inlined_call_operand.<no memory space> [shape: f32[1,1], index: 6, kind: input, shape index: {}]
  %s7 = inlined_call_operand.hbm [shape: f32[1,8], index: 7, kind: output, shape index: {}]
  %s8 = sld [smem:[#allocation0]]
  $region50: #{tpu_custom_call.1} parent=0
    _
  %s10 = ssub.s32 1, %s8
  %s11 = scalar_select 0, %s10, %s8
  %v12 = vstv %s6
  %13 = vst [vmem:[#allocation2] sm:$0x1] %v12
  $region1: #{tpu_custom_call.1} parent=0
    #allocation3 [shape = 'u8[2048]{0}', space=vmem, size = 0x800, scoped, tag = 'input window, operand 0, single buffered']
    #allocation4 [shape = 's32[1]{0}', space=sflag, size = 0x4, scoped, tag = 'scoped memory for tpu_custom_call.1']
    #allocation5 [shape = 's32[1]{0}', space=sflag, size = 0x4, scoped, tag = 'scoped memory for tpu_custom_call.1']
    #allocation6 [shape = 'u8[4096]{0}', space=vmem, size = 0x1000, scoped, tag = 'input window, operand 1, single buffered']
    #allocation7 [shape = 's32[1]{0}', space=sflag, size = 0x4, scoped, tag = 'scoped memory for tpu_custom_call.1']
    #allocation8 [shape = 'u8[32768]{0}', space=vmem, size = 0x8000, scoped, tag = 'input window, operand 3, single buffered']
    #allocation9 [shape = 'u8[512]{0}', space=vmem, size = 0x400, scoped, tag = 'output window, operand 0, single buffered']
    %14 = vsyncpa [#allocation4], 0
    %15 = vsyncpa [#allocation7], 0
    %16 = vsyncpa [#allocation5], 0
    // Predicated region
    $region2: #{tpu_custom_call.1} parent=1 // pred_check
      _
    $region3: #{tpu_custom_call.1} parent=1 // pred_check_branch
      %18 = sbr.rel (0) target = $region5
    $region4: #{tpu_custom_call.1} parent=1 // pred_region
      %s20 = ssub.s32 64, 64
      %21 = vsyncadd [#allocation4], %s20
      %s23 = sshll.u32 [#allocation3], 4
      %s24 = int_to_ptr.vmem [resolvable:$true] %s23
      %26 = dma.hbm_to_vmem [thread:$0]  %s0, 64, %s24, [#allocation4]
    $region5: #{tpu_custom_call.1} parent=1 // pred_fallthru
      _
    // Predicated region
    $region6: #{tpu_custom_call.1} parent=1 // pred_check
      _
    $region7: #{tpu_custom_call.1} parent=1 // pred_check_branch
      %28 = sbr.rel (0) target = $region9
    $region8: #{tpu_custom_call.1} parent=1 // pred_region
      %s30 = ssub.s32 128, 128
      %31 = vsyncadd [#allocation7], %s30
      %s32 = sshll.u32 [#allocation6], 4
      %s33 = int_to_ptr.vmem [resolvable:$true] %s32
      %38 = dma.hbm_to_vmem [thread:$0]  %s1, 128, %s33, [#allocation7], 64, 64, 4
    $region9: #{tpu_custom_call.1} parent=1 // pred_fallthru
      _
    // Predicated region
    $region10: #{tpu_custom_call.1} parent=1 // pred_check
      _
    $region11: #{tpu_custom_call.1} parent=1 // pred_check_branch
      %40 = sbr.rel (0) target = $region13
    $region12: #{tpu_custom_call.1} parent=1 // pred_region
      _
    $region13: #{tpu_custom_call.1} parent=1 // pred_fallthru
      _
    // Predicated region
    $region14: #{tpu_custom_call.1} parent=1 // pred_check
      _
    $region15: #{tpu_custom_call.1} parent=1 // pred_check_branch
      %42 = sbr.rel (0) target = $region17
    $region16: #{tpu_custom_call.1} parent=1 // pred_region
      %s44 = ssub.s32 1024, 1024
      %45 = vsyncadd [#allocation7], %s44
      %s46 = sshll.u32 [#allocation8], 4
      %s47 = int_to_ptr.vmem [resolvable:$true] %s46
      %52 = dma.hbm_to_vmem [thread:$0]  %s3, 1024, %s47, [#allocation7], 64, 64, 4
    $region17: #{tpu_custom_call.1} parent=1 // pred_fallthru
      _
    // Predicated region
    $region18: #{tpu_custom_call.1} parent=1 // pred_check
      _
    $region19: #{tpu_custom_call.1} parent=1 // pred_check_branch
      %54 = sbr.rel (0) target = $region21
    $region20: #{tpu_custom_call.1} parent=1 // pred_region
      _
    $region21: #{tpu_custom_call.1} parent=1 // pred_fallthru
      _
    // Predicated region
    $region22: #{tpu_custom_call.1} parent=1 // pred_check
      _
    $region23: #{tpu_custom_call.1} parent=1 // pred_check_branch
      %56 = sbr.rel (0) target = $region25
    $region24: #{tpu_custom_call.1} parent=1 // pred_region
      _
    $region25: #{tpu_custom_call.1} parent=1 // pred_fallthru
      _
    // Predicated region
    $region26: #{tpu_custom_call.1} parent=1 // pred_check
      _
    $region27: #{tpu_custom_call.1} parent=1 // pred_check_branch
      %58 = sbr.rel (0) target = $region29
    $region28: #{tpu_custom_call.1} parent=1 // pred_region
      _
    $region29: #{tpu_custom_call.1} parent=1 // pred_fallthru
      _
    // Predicated region
    $region30: #{tpu_custom_call.1} parent=1 // pred_check
      _
    $region31: #{tpu_custom_call.1} parent=1 // pred_check_branch
      %60 = sbr.rel (0) target = $region33
    $region32: #{tpu_custom_call.1} parent=1 // pred_region
      %61 = dma.done [#allocation4], 64
    $region33: #{tpu_custom_call.1} parent=1 // pred_fallthru
      _
    // Predicated region
    $region34: #{tpu_custom_call.1} parent=1 // pred_check
      _
    $region35: #{tpu_custom_call.1} parent=1 // pred_check_branch
      %63 = sbr.rel (0) target = $region37
    $region36: #{tpu_custom_call.1} parent=1 // pred_region
      %64 = dma.done [#allocation7], 128
    $region37: #{tpu_custom_call.1} parent=1 // pred_fallthru
      _
    // Predicated region
    $region38: #{tpu_custom_call.1} parent=1 // pred_check
      _
    $region39: #{tpu_custom_call.1} parent=1 // pred_check_branch
      %66 = sbr.rel (0) target = $region41
    $region40: #{tpu_custom_call.1} parent=1 // pred_region
      %67 = dma.done [#allocation7], 1024
    $region41: #{tpu_custom_call.1} parent=1 // pred_fallthru
      _
    %v69 = vld [vmem:[#allocation3] sm:$0xf]
    %v70 = vld [vmem:[#allocation6] sm:$0xf]
    %v71 = vld [vmem:[#allocation6 + $0x4] sm:$0x3]
    %v72 = vld [vmem:[%s2] sm:$0x1]
    %v74 = vlaneseq
    %v75 = vshrl.u32 %v74, 7
    %v76 = vsub.s32 0, %v75
    %v77 = vrot.slane %v72, %v76
    %v81 = vunpack.c.l.b16 %v70
    %v82 = vunpack.c.l.b16 %v71
    %v83 = vpack.c.b16 %v82, %v81
    %vm84 = vcmask 97280
    %v86 = vsel %vm84, %v69, 0
    %vm88 = vcmask 1045504
    %v90 = vsel %vm88, %v83, 0
    %92 = vmatprep.subr.bf16.mxu0 0
    %93 = vmatpush1.bf16.msra.mxu0 %v90
    %94 = vmatprep.subr.bf16.mxu0 0
    %95 = vmatpush1.bf16.msra.mxu0 0
    %96 = vmatprep.subr.bf16.mxu0 0
    %97 = vmatpush1.bf16.msra.mxu0 0
    %98 = vmatprep.subr.bf16.mxu0 0
    %99 = vmatpush1.bf16.msra.mxu0 0
    %100 = vmatprep.subr.bf16.mxu0 0
    %101 = vmatpush1.bf16.msra.mxu0 0
    %102 = vmatprep.subr.bf16.mxu0 0
    %103 = vmatpush1.bf16.msra.mxu0 0
    %104 = vmatprep.subr.bf16.mxu0 0
    %105 = vmatpush1.bf16.msra.mxu0 0
    %106 = vmatprep.subr.bf16.mxu0 0
    %107 = vmatpush1.bf16.msra.mxu0 0
    %108 = vmatprep.subr.bf16.mxu0 0
    %109 = vmatpush1.bf16.msra.mxu0 0
    %110 = vmatprep.subr.bf16.mxu0 0
    %111 = vmatpush1.bf16.msra.mxu0 0
    %112 = vmatprep.subr.bf16.mxu0 0
    %113 = vmatpush1.bf16.msra.mxu0 0
    %114 = vmatprep.subr.bf16.mxu0 0
    %115 = vmatpush1.bf16.msra.mxu0 0
    %116 = vmatprep.subr.bf16.mxu0 0
    %117 = vmatpush1.bf16.msra.mxu0 0
    %118 = vmatprep.subr.bf16.mxu0 0
    %119 = vmatpush1.bf16.msra.mxu0 0
    %120 = vmatprep.subr.bf16.mxu0 0
    %121 = vmatpush1.bf16.msra.mxu0 0
    %122 = vmatprep.subr.bf16.mxu0 0
    %123 = vmatpush1.bf16.msra.mxu0 0
    %124 = vmatprep.mubr.bf16.mxu0 0
    %125 = vmatmul.mubr.bf16.gmra.mrb[0].mxu0 %v86
    %v126 = vpop.f32.mrb[0].mxu0
    %v127 = vadd.f32 %v77, %v126
    %v128 = vpop.f32.mrb[0].mxu0
    %v129 = vpop.f32.mrb[0].mxu0
    %v130 = vpop.f32.mrb[0].mxu0
    %131 = vdwg.mxu0
    %v132 = vmax.f32 %v127, 0.0
    %v133 = vpack.c.bf16 %v132, %v132
    %v134 = vld [vmem:[#allocation8] sm:$0xf]
    %v135 = vld [vmem:[#allocation8 + $0x4] sm:$0xf]
    %v136 = vld [vmem:[#allocation8 + $0x8] sm:$0xf]
    %v137 = vld [vmem:[#allocation8 + $0xc] sm:$0xf]
    %v138 = vld [vmem:[#allocation8 + $0x10] sm:$0xf]
    %v139 = vld [vmem:[#allocation8 + $0x14] sm:$0xf]
    %v140 = vld [vmem:[#allocation8 + $0x18] sm:$0xf]
    %v141 = vld [vmem:[#allocation8 + $0x1c] sm:$0xf]
    %v142 = vld [vmem:[#allocation8 + $0x20] sm:$0xf]
    %v143 = vld [vmem:[#allocation8 + $0x24] sm:$0xf]
    %v144 = vld [vmem:[#allocation8 + $0x28] sm:$0xf]
    %v145 = vld [vmem:[#allocation8 + $0x2c] sm:$0xf]
    %v146 = vld [vmem:[#allocation8 + $0x30] sm:$0xf]
    %v147 = vld [vmem:[#allocation8 + $0x34] sm:$0xf]
    %v148 = vld [vmem:[#allocation8 + $0x38] sm:$0xf]
    %v149 = vld [vmem:[#allocation8 + $0x3c] sm:$0xf]
    %v150 = vld [vmem:[%s4] sm:$0x1]
    %v152 = vlaneseq
    %v153 = vshrl.u32 %v152, 7
    %v154 = vsub.s32 0, %v153
    %v155 = vrot.slane %v150, %v154
    %v173 = vunpack.c.l.b16 %v134
    %v174 = vunpack.c.l.b16 %v135
    %v175 = vunpack.c.l.b16 %v136
    %v176 = vunpack.c.l.b16 %v137
    %v177 = vunpack.c.l.b16 %v138
    %v178 = vunpack.c.l.b16 %v139
    %v179 = vunpack.c.l.b16 %v140
    %v180 = vunpack.c.l.b16 %v141
    %v181 = vunpack.c.l.b16 %v142
    %v182 = vunpack.c.l.b16 %v143
    %v183 = vunpack.c.l.b16 %v144
    %v184 = vunpack.c.l.b16 %v145
    %v185 = vunpack.c.l.b16 %v146
    %v186 = vunpack.c.l.b16 %v147
    %v187 = vunpack.c.l.b16 %v148
    %v188 = vunpack.c.l.b16 %v149
    %v189 = vpack.c.b16 %v174, %v173
    %v190 = vpack.c.b16 %v176, %v175
    %v191 = vpack.c.b16 %v178, %v177
    %v192 = vpack.c.b16 %v180, %v179
    %v193 = vpack.c.b16 %v182, %v181
    %v194 = vpack.c.b16 %v184, %v183
    %v195 = vpack.c.b16 %v186, %v185
    %v196 = vpack.c.b16 %v188, %v187
    %205 = vmatprep.subr.bf16.mxu0 0
    %206 = vmatpush1.bf16.msra.mxu0 %v189
    %207 = vmatprep.subr.bf16.mxu0 0
    %208 = vmatpush1.bf16.msra.mxu0 %v190
    %209 = vmatprep.subr.bf16.mxu0 0
    %210 = vmatpush1.bf16.msra.mxu0 %v191
    %211 = vmatprep.subr.bf16.mxu0 0
    %212 = vmatpush1.bf16.msra.mxu0 %v192
    %213 = vmatprep.subr.bf16.mxu0 0
    %214 = vmatpush1.bf16.msra.mxu0 %v193
    %215 = vmatprep.subr.bf16.mxu0 0
    %216 = vmatpush1.bf16.msra.mxu0 %v194
    %217 = vmatprep.subr.bf16.mxu0 0
    %218 = vmatpush1.bf16.msra.mxu0 %v195
    %219 = vmatprep.subr.bf16.mxu0 0
    %220 = vmatpush1.bf16.msra.mxu0 %v196
    %221 = vmatprep.subr.bf16.mxu0 0
    %222 = vmatpush1.bf16.msra.mxu0 0
    %223 = vmatprep.subr.bf16.mxu0 0
    %224 = vmatpush1.bf16.msra.mxu0 0
    %225 = vmatprep.subr.bf16.mxu0 0
    %226 = vmatpush1.bf16.msra.mxu0 0
    %227 = vmatprep.subr.bf16.mxu0 0
    %228 = vmatpush1.bf16.msra.mxu0 0
    %229 = vmatprep.subr.bf16.mxu0 0
    %230 = vmatpush1.bf16.msra.mxu0 0
    %231 = vmatprep.subr.bf16.mxu0 0
    %232 = vmatpush1.bf16.msra.mxu0 0
    %233 = vmatprep.subr.bf16.mxu0 0
    %234 = vmatpush1.bf16.msra.mxu0 0
    %235 = vmatprep.subr.bf16.mxu0 0
    %236 = vmatpush1.bf16.msra.mxu0 0
    %237 = vmatprep.mubr.bf16.mxu0 0
    %238 = vmatmul.mubr.bf16.gmra.mrb[0].mxu0 %v133
    %v239 = vpop.f32.mrb[0].mxu0
    %v240 = vadd.f32 %v155, %v239
    %v241 = vpop.f32.mrb[0].mxu0
    %v242 = vpop.f32.mrb[0].mxu0
    %v243 = vpop.f32.mrb[0].mxu0
    %244 = vdwg.mxu0
    %v245 = vmax.f32 %v240, 0.0
    %v246 = vld [vmem:[%s5] sm:$0x1]
    %v247 = vpack.c.bf16 %v245, %v245
    %v248 = vld [vmem:[#allocation2] sm:$0x1]
    %250 = vset.pattern.permute.xlu0 0
    %251 = vperm.xlu0 %250, %v248
    %v252 = vpop.permute.xlu0 %251
    %v254 = vlaneseq
    %v255 = vshrl.u32 %v254, 7
    %v256 = vsub.s32 0, %v255
    %v257 = vrot.slane %v252, %v256
    %258 = vmatprep.subr.bf16.mxu0 0
    %259 = vmatpush1.bf16.xpose.msra.mxu0 %v247
    %260 = vmatprep.subr.bf16.mxu0 0
    %261 = vmatpush1.bf16.xpose.msra.mxu0 0
    %262 = vmatprep.subr.bf16.mxu0 0
    %263 = vmatpush1.bf16.xpose.msra.mxu0 0
    %264 = vmatprep.subr.bf16.mxu0 0
    %265 = vmatpush1.bf16.xpose.msra.mxu0 0
    %266 = vmatprep.subr.bf16.mxu0 0
    %267 = vmatpush1.bf16.xpose.msra.mxu0 0
    %268 = vmatprep.subr.bf16.mxu0 0
    %269 = vmatpush1.bf16.xpose.msra.mxu0 0
    %270 = vmatprep.subr.bf16.mxu0 0
    %271 = vmatpush1.bf16.xpose.msra.mxu0 0
    %272 = vmatprep.subr.bf16.mxu0 0
    %273 = vmatpush1.bf16.xpose.msra.mxu0 0
    %274 = vmatprep.subr.bf16.mxu0 0
    %275 = vmatpush1.bf16.xpose.msra.mxu0 0
    %276 = vmatprep.subr.bf16.mxu0 0
    %277 = vmatpush1.bf16.xpose.msra.mxu0 0
    %278 = vmatprep.subr.bf16.mxu0 0
    %279 = vmatpush1.bf16.xpose.msra.mxu0 0
    %280 = vmatprep.subr.bf16.mxu0 0
    %281 = vmatpush1.bf16.xpose.msra.mxu0 0
    %282 = vmatprep.subr.bf16.mxu0 0
    %283 = vmatpush1.bf16.xpose.msra.mxu0 0
    %284 = vmatprep.subr.bf16.mxu0 0
    %285 = vmatpush1.bf16.xpose.msra.mxu0 0
    %286 = vmatprep.subr.bf16.mxu0 0
    %287 = vmatpush1.bf16.xpose.msra.mxu0 0
    %288 = vmatprep.subr.bf16.mxu0 0
    %289 = vmatpush1.bf16.xpose.msra.mxu0 0
    %290 = vmatprep.mubr.bf16.mxu0 0
    %291 = vmatmul.mubr.bf16.gmra.mrb[0].mxu0 %v246
    %v292 = vpop.f32.mrb[0].mxu0
    %v293 = vadd.f32 %v257, %v292
    %v294 = vpop.f32.mrb[0].mxu0
    %v295 = vpop.f32.mrb[0].mxu0
    %v296 = vpop.f32.mrb[0].mxu0
    %297 = vdwg.mxu0
    %vm298 = vcmask 57344
    %299 = vst.msk [vmem:[#allocation9] sm:$0x1] %vm298, %v293
    // Predicated region
    $region42: #{tpu_custom_call.1} parent=1 // pred_check
      _
    $region43: #{tpu_custom_call.1} parent=1 // pred_check_branch
      %301 = sbr.rel (0) target = $region45
    $region44: #{tpu_custom_call.1} parent=1 // pred_region
      %s303 = ssub.s32 16, 16
      %304 = vsyncadd [#allocation5], %s303
      %s306 = sshll.u32 [#allocation9], 4
      %s307 = int_to_ptr.vmem [resolvable:$true] %s306
      %309 = dma.vmem_to_hbm [thread:$0]  %s307, 16, %s7, [#allocation5]
    $region45: #{tpu_custom_call.1} parent=1 // pred_fallthru
      _
    // Predicated region
    $region46: #{tpu_custom_call.1} parent=1 // pred_check
      _
    $region47: #{tpu_custom_call.1} parent=1 // pred_check_branch
      %311 = sbr.rel (0) target = $region49
    $region48: #{tpu_custom_call.1} parent=1 // pred_region
      %312 = dma.done [#allocation5], 16
    $region49: #{tpu_custom_call.1} parent=1 // pred_fallthru
      _
    %313 = vsyncpa [#allocation4], 1
    %314 = vsyncpa [#allocation7], 1
    %315 = vsyncpa [#allocation5], 1

</llo_original>
